<compile_context>
chip_gen: v6e
topology: v6e:2x2x1
jax: 0.10.0
libtpu: 0.0.40
codegen_flags: <defaults>
</compile_context>

<pallas_src>
import functools

import jax
import jax.numpy as jnp
from jax.experimental import pallas as pl
from jax.experimental.pallas import tpu as pltpu


def _residual_kernel(x_ref, w3_ref, w1_ref, o_ref, xpad_ref, pat_ref,
                     *, H, W, C, Cp, PAD):
    """One batch element per grid step; channels on sublanes, H*W on lanes.

    x_ref    : (1, C, H*W)          input image (lane-dense)
    w3_ref   : (C, 9*Cp)            3x3 weights, K = tap-major / Cin-minor (Cin padded)
    w1_ref   : (C, C)               1x1 weights (Cout, Cin)
    o_ref    : (1, C, H*W)          output (lane-dense store)
    xpad_ref : (Cp, PAD+H*W+PAD)    flat relu(x) with a zero lane halo (VMEM scratch)
    pat_ref  : (9*Cp, H*W)          im2col patch matrix (VMEM scratch)
    """
    HW = H * W

    x = x_ref[0]                               # (C, HW) f32
    xr = jnp.maximum(x, 0.0)                   # first ReLU

    # Flat zero halo: a spatial shift by (dy, dx) becomes a static lane slice
    # at offset PAD + dy*W + dx.  Vertical out-of-range taps land in the halo;
    # rows C..Cp-1 stay zero so the padded-K weight columns contribute nothing.
    xpad_ref[...] = jnp.zeros_like(xpad_ref)
    xpad_ref[:C, PAD:PAD + HW] = xr            # PAD is lane-aligned (128k)

    # Column masks kill the horizontal wrap (w==0 / w==W-1 would otherwise read
    # the neighbouring row after the flat shift).
    col = jax.lax.broadcasted_iota(jnp.int32, (Cp, HW), 1) % W
    not_first = col != 0                       # valid lanes for dx = -1
    not_last = col != (W - 1)                  # valid lanes for dx = +1

    # im2col: stack the 9 shifted taps on sublanes -> (9*Cp, HW).
    t = 0
    for dy in (-1, 0, 1):
        for dx in (-1, 0, 1):
            off = PAD + dy * W + dx
            tap = xpad_ref[:, off:off + HW]    # (Cp, HW)
            if dx == 1:
                tap = jnp.where(not_last, tap, 0.0)
            elif dx == -1:
                tap = jnp.where(not_first, tap, 0.0)
            pat_ref[t * Cp:(t + 1) * Cp, :] = tap   # 8-aligned sublane store
            t += 1

    # 3x3 conv as ONE MXU matmul (K = 9*Cp), second ReLU, then the 1x1 conv.
    h = jnp.dot(w3_ref[...], pat_ref[...], preferred_element_type=jnp.float32)
    h = jnp.maximum(h, 0.0)                    # (C, HW)
    y = jnp.dot(w1_ref[...], h, preferred_element_type=jnp.float32)

    # Residual add + lane-dense store.
    o_ref[0] = (x + y).astype(o_ref.dtype)


def residual_forward(x_nchw, w3_oihw, w1_oihw):
    """x_nchw: (N, C, H, W) f32; weights in PyTorch layout (Cout, Cin, kH, kW)."""
    N, C, H, W = x_nchw.shape
    HW = H * W
    Cp = ((C + 7) // 8) * 8                    # channels rounded to a sublane multiple
    PAD = ((W + 1 + 127) // 128) * 128         # lane-aligned halo, >= W+1

    # Free layout plumbing: NCHW is contiguous, so (N, C, H*W) is a pure reshape.
    x_flat = x_nchw.reshape(N, C, HW)

    # 3x3 weight -> (Cout, 9*Cp): K ordered (ky, kx)-major / Cin-minor, Cin zero-padded.
    w3_k = jnp.transpose(w3_oihw, (0, 2, 3, 1))                      # (Cout, kH, kW, Cin)
    w3_k = jnp.pad(w3_k, ((0, 0), (0, 0), (0, 0), (0, Cp - C)))
    w3_k = w3_k.reshape(C, 9 * Cp)
    w1_k = w1_oihw[:, :, 0, 0]                                       # (Cout, Cin)

    kernel = functools.partial(_residual_kernel, H=H, W=W, C=C, Cp=Cp, PAD=PAD)

    # TODO(synk): if H/W/C are scaled up (v7x: 64 MiB VMEM), retile over H rows
    # with a 1-row halo instead of whole-image blocks and set vmem_limit_bytes.
    out_flat = pl.pallas_call(
        kernel,
        out_shape=jax.ShapeDtypeStruct((N, C, HW), x_nchw.dtype),
        grid_spec=pltpu.PrefetchScalarGridSpec(
            num_scalar_prefetch=0,
            grid=(N,),
            in_specs=[
                pl.BlockSpec((1, C, HW), lambda n: (n, 0, 0)),
                pl.BlockSpec((C, 9 * Cp), lambda n: (0, 0)),
                pl.BlockSpec((C, C), lambda n: (0, 0)),
            ],
            out_specs=pl.BlockSpec((1, C, HW), lambda n: (n, 0, 0)),
            scratch_shapes=[
                pltpu.VMEM((Cp, PAD + HW + PAD), jnp.float32),   # flat haloed relu(x)
                pltpu.VMEM((9 * Cp, HW), jnp.float32),           # im2col patches
            ],
        ),
        compiler_params=pltpu.CompilerParams(
            dimension_semantics=("parallel",)),                  # megacore on v7x
    )(x_flat, w3_k, w1_k)

    return out_flat.reshape(N, C, H, W)


def _reference(x_nchw, w3_oihw, w1_oihw):
    """Pure-JAX reference: x + conv1x1(relu(conv3x3(relu(x)))), NCHW/OIHW."""
    h = jax.nn.relu(x_nchw)
    h = jax.lax.conv_general_dilated(
        h, w3_oihw, window_strides=(1, 1), padding=((1, 1), (1, 1)),
        dimension_numbers=("NCHW", "OIHW", "NCHW"))
    h = jax.nn.relu(h)
    h = jax.lax.conv_general_dilated(
        h, w1_oihw, window_strides=(1, 1), padding="VALID",
        dimension_numbers=("NCHW", "OIHW", "NCHW"))
    return x_nchw + h


if __name__ == "__main__":
    key = jax.random.PRNGKey(0)
    k_x, k_w3, k_w1 = jax.random.split(key, 3)

    N, C, H, W = 2, 4, 16, 16    # matches nn.Conv2d(in_channels=C, out_channels=C, ...)

    # Deterministic synthetic input / weights in PyTorch layouts.
    x_nchw = jax.random.normal(k_x, (N, C, H, W), dtype=jnp.float32)
    w3_torch = jax.random.normal(k_w3, (C, C, 3, 3), dtype=jnp.float32) * 0.2
    w1_torch = jax.random.normal(k_w1, (C, C, 1, 1), dtype=jnp.float32) * 0.2

    out = residual_forward(x_nchw, w3_torch, w1_torch)
    out = jax.block_until_ready(out)

    ref = _reference(x_nchw, w3_torch, w1_torch)
    assert out.shape == (N, C, H, W)
    assert jnp.allclose(out, ref, atol=1e-4, rtol=1e-4), "mismatch vs reference"

    print("KERNEL_OK")
</pallas_src>

<mosaic_0001>
module attributes {stable_mosaic.version = 11 : i64} {
  func.func @_residual_kernel(%arg0: i32, %arg1: memref<1x4x256xf32, #tpu.memory_space<vmem>>, %arg2: memref<4x72xf32, #tpu.memory_space<vmem>>, %arg3: memref<4x4xf32, #tpu.memory_space<vmem>>, %arg4: memref<1x4x256xf32, #tpu.memory_space<vmem>>, %arg5: memref<8x512xf32, #tpu.memory_space<vmem>>, %arg6: memref<72x256xf32, #tpu.memory_space<vmem>>) attributes {dimension_semantics = [#tpu.dimension_semantics<parallel>], iteration_bounds = array<i64: 2>, scalar_prefetch = 0 : i64, scratch_operands = 2 : i64, tpu.core_type = #tpu.core_type<tc>, window_params = [{transform_indices = @transform_0, window_bounds = array<i64: 1, 4, 256>}, {pipeline_mode = #tpu.pipeline_mode<synchronous>, transform_indices = @transform_1, window_bounds = array<i64: 4, 72>}, {pipeline_mode = #tpu.pipeline_mode<synchronous>, transform_indices = @transform_2, window_bounds = array<i64: 4, 4>}, {transform_indices = @transform_3, window_bounds = array<i64: 1, 4, 256>}]} {
    %c0 = arith.constant 0 : index
    %c0_0 = arith.constant 0 : index
    %c0_1 = arith.constant 0 : index
    %0 = vector.load %arg1[%c0, %c0_0, %c0_1] : memref<1x4x256xf32, #tpu.memory_space<vmem>>, vector<1x4x256xf32>
    %1 = vector.shape_cast %0 : vector<1x4x256xf32> to vector<4x256xf32>
    %cst = arith.constant 0.000000e+00 : f32
    %2 = vector.broadcast %cst : f32 to vector<4x256xf32>
    %3 = arith.maximumf %1, %2 : vector<4x256xf32>
    %cst_2 = arith.constant 0.000000e+00 : f32
    %4 = vector.broadcast %cst_2 : f32 to vector<8x512xf32>
    %c0_3 = arith.constant 0 : index
    %c0_4 = arith.constant 0 : index
    %5 = vector.load %arg5[%c0_3, %c0_4] : memref<8x512xf32, #tpu.memory_space<vmem>>, vector<8x512xf32>
    tpu.vector_store %arg5[%c0_3, %c0_4], %4 {strides = array<i32>} : memref<8x512xf32, #tpu.memory_space<vmem>>, vector<8x512xf32>,
    %c0_5 = arith.constant 0 : index
    %c128 = arith.constant 128 : index
    %6 = vector.load %arg5[%c0_5, %c128] : memref<8x512xf32, #tpu.memory_space<vmem>>, vector<4x256xf32>
    tpu.vector_store %arg5[%c0_5, %c128], %3 {strides = array<i32>} : memref<8x512xf32, #tpu.memory_space<vmem>>, vector<4x256xf32>,
    %7 = tpu.iota {dimensions = array<i32: 1>} : vector<8x256xi32>
    %c16_i32 = arith.constant 16 : i32
    %c0_i32 = arith.constant 0 : i32
    %8 = arith.cmpi eq, %c16_i32, %c0_i32 : i32
    %c1_i32 = arith.constant 1 : i32
    %9 = arith.select %8, %c1_i32, %c16_i32 : i32
    %10 = vector.broadcast %9 : i32 to vector<8x256xi32>
    %11 = arith.remsi %7, %10 : vector<8x256xi32>
    %c0_i32_6 = arith.constant 0 : i32
    %12 = vector.broadcast %c0_i32_6 : i32 to vector<8x256xi32>
    %13 = arith.cmpi ne, %11, %12 : vector<8x256xi32>
    %c0_i32_7 = arith.constant 0 : i32
    %14 = vector.broadcast %c0_i32_7 : i32 to vector<8x256xi32>
    %15 = arith.cmpi slt, %11, %14 : vector<8x256xi32>
    %c0_i32_8 = arith.constant 0 : i32
    %16 = arith.cmpi slt, %9, %c0_i32_8 : i32
    %17 = vector.broadcast %16 : i1 to vector<8x256xi1>
    %18 = vector.broadcast %17 : vector<8x256xi1> to vector<8x256xi1>
    %19 = arith.xori %15, %18 : vector<8x256xi1>
    %20 = arith.andi %19, %13 : vector<8x256xi1>
    %21 = vector.broadcast %9 : i32 to vector<8x256xi32>
    %22 = arith.addi %11, %21 : vector<8x256xi32>
    %23 = arith.select %20, %22, %11 : vector<8x256xi1>, vector<8x256xi32>
    %c0_i32_9 = arith.constant 0 : i32
    %24 = vector.broadcast %c0_i32_9 : i32 to vector<8x256xi32>
    %25 = arith.cmpi ne, %23, %24 : vector<8x256xi32>
    %c15_i32 = arith.constant 15 : i32
    %26 = vector.broadcast %c15_i32 : i32 to vector<8x256xi32>
    %27 = arith.cmpi ne, %23, %26 : vector<8x256xi32>
    %c0_10 = arith.constant 0 : index
    %c111 = arith.constant 111 : index
    %28 = vector.load %arg5[%c0_10, %c111] : memref<8x512xf32, #tpu.memory_space<vmem>>, vector<8x256xf32>
    %cst_11 = arith.constant 0.000000e+00 : f32
    %29 = vector.broadcast %cst_11 : f32 to vector<8x256xf32>
    %30 = arith.select %25, %28, %29 : vector<8x256xi1>, vector<8x256xf32>
    %c0_12 = arith.constant 0 : index
    %c0_13 = arith.constant 0 : index
    %31 = vector.load %arg6[%c0_12, %c0_13] : memref<72x256xf32, #tpu.memory_space<vmem>>, vector<8x256xf32>
    tpu.vector_store %arg6[%c0_12, %c0_13], %30 {strides = array<i32>} : memref<72x256xf32, #tpu.memory_space<vmem>>, vector<8x256xf32>,
    %c0_14 = arith.constant 0 : index
    %c112 = arith.constant 112 : index
    %32 = vector.load %arg5[%c0_14, %c112] : memref<8x512xf32, #tpu.memory_space<vmem>>, vector<8x256xf32>
    %c8 = arith.constant 8 : index
    %c0_15 = arith.constant 0 : index
    %33 = vector.load %arg6[%c8, %c0_15] : memref<72x256xf32, #tpu.memory_space<vmem>>, vector<8x256xf32>
    tpu.vector_store %arg6[%c8, %c0_15], %32 {strides = array<i32>} : memref<72x256xf32, #tpu.memory_space<vmem>>, vector<8x256xf32>,
    %c0_16 = arith.constant 0 : index
    %c113 = arith.constant 113 : index
    %34 = vector.load %arg5[%c0_16, %c113] : memref<8x512xf32, #tpu.memory_space<vmem>>, vector<8x256xf32>
    %cst_17 = arith.constant 0.000000e+00 : f32
    %35 = vector.broadcast %cst_17 : f32 to vector<8x256xf32>
    %36 = arith.select %27, %34, %35 : vector<8x256xi1>, vector<8x256xf32>
    %c16 = arith.constant 16 : index
    %c0_18 = arith.constant 0 : index
    %37 = vector.load %arg6[%c16, %c0_18] : memref<72x256xf32, #tpu.memory_space<vmem>>, vector<8x256xf32>
    tpu.vector_store %arg6[%c16, %c0_18], %36 {strides = array<i32>} : memref<72x256xf32, #tpu.memory_space<vmem>>, vector<8x256xf32>,
    %c0_19 = arith.constant 0 : index
    %c127 = arith.constant 127 : index
    %38 = vector.load %arg5[%c0_19, %c127] : memref<8x512xf32, #tpu.memory_space<vmem>>, vector<8x256xf32>
    %cst_20 = arith.constant 0.000000e+00 : f32
    %39 = vector.broadcast %cst_20 : f32 to vector<8x256xf32>
    %40 = arith.select %25, %38, %39 : vector<8x256xi1>, vector<8x256xf32>
    %c24 = arith.constant 24 : index
    %c0_21 = arith.constant 0 : index
    %41 = vector.load %arg6[%c24, %c0_21] : memref<72x256xf32, #tpu.memory_space<vmem>>, vector<8x256xf32>
    tpu.vector_store %arg6[%c24, %c0_21], %40 {strides = array<i32>} : memref<72x256xf32, #tpu.memory_space<vmem>>, vector<8x256xf32>,
    %c0_22 = arith.constant 0 : index
    %c128_23 = arith.constant 128 : index
    %42 = vector.load %arg5[%c0_22, %c128_23] : memref<8x512xf32, #tpu.memory_space<vmem>>, vector<8x256xf32>
    %c32 = arith.constant 32 : index
    %c0_24 = arith.constant 0 : index
    %43 = vector.load %arg6[%c32, %c0_24] : memref<72x256xf32, #tpu.memory_space<vmem>>, vector<8x256xf32>
    tpu.vector_store %arg6[%c32, %c0_24], %42 {strides = array<i32>} : memref<72x256xf32, #tpu.memory_space<vmem>>, vector<8x256xf32>,
    %c0_25 = arith.constant 0 : index
    %c129 = arith.constant 129 : index
    %44 = vector.load %arg5[%c0_25, %c129] : memref<8x512xf32, #tpu.memory_space<vmem>>, vector<8x256xf32>
    %cst_26 = arith.constant 0.000000e+00 : f32
    %45 = vector.broadcast %cst_26 : f32 to vector<8x256xf32>
    %46 = arith.select %27, %44, %45 : vector<8x256xi1>, vector<8x256xf32>
    %c40 = arith.constant 40 : index
    %c0_27 = arith.constant 0 : index
    %47 = vector.load %arg6[%c40, %c0_27] : memref<72x256xf32, #tpu.memory_space<vmem>>, vector<8x256xf32>
    tpu.vector_store %arg6[%c40, %c0_27], %46 {strides = array<i32>} : memref<72x256xf32, #tpu.memory_space<vmem>>, vector<8x256xf32>,
    %c0_28 = arith.constant 0 : index
    %c143 = arith.constant 143 : index
    %48 = vector.load %arg5[%c0_28, %c143] : memref<8x512xf32, #tpu.memory_space<vmem>>, vector<8x256xf32>
    %cst_29 = arith.constant 0.000000e+00 : f32
    %49 = vector.broadcast %cst_29 : f32 to vector<8x256xf32>
    %50 = arith.select %25, %48, %49 : vector<8x256xi1>, vector<8x256xf32>
    %c48 = arith.constant 48 : index
    %c0_30 = arith.constant 0 : index
    %51 = vector.load %arg6[%c48, %c0_30] : memref<72x256xf32, #tpu.memory_space<vmem>>, vector<8x256xf32>
    tpu.vector_store %arg6[%c48, %c0_30], %50 {strides = array<i32>} : memref<72x256xf32, #tpu.memory_space<vmem>>, vector<8x256xf32>,
    %c0_31 = arith.constant 0 : index
    %c144 = arith.constant 144 : index
    %52 = vector.load %arg5[%c0_31, %c144] : memref<8x512xf32, #tpu.memory_space<vmem>>, vector<8x256xf32>
    %c56 = arith.constant 56 : index
    %c0_32 = arith.constant 0 : index
    %53 = vector.load %arg6[%c56, %c0_32] : memref<72x256xf32, #tpu.memory_space<vmem>>, vector<8x256xf32>
    tpu.vector_store %arg6[%c56, %c0_32], %52 {strides = array<i32>} : memref<72x256xf32, #tpu.memory_space<vmem>>, vector<8x256xf32>,
    %c0_33 = arith.constant 0 : index
    %c145 = arith.constant 145 : index
    %54 = vector.load %arg5[%c0_33, %c145] : memref<8x512xf32, #tpu.memory_space<vmem>>, vector<8x256xf32>
    %cst_34 = arith.constant 0.000000e+00 : f32
    %55 = vector.broadcast %cst_34 : f32 to vector<8x256xf32>
    %56 = arith.select %27, %54, %55 : vector<8x256xi1>, vector<8x256xf32>
    %c64 = arith.constant 64 : index
    %c0_35 = arith.constant 0 : index
    %57 = vector.load %arg6[%c64, %c0_35] : memref<72x256xf32, #tpu.memory_space<vmem>>, vector<8x256xf32>
    tpu.vector_store %arg6[%c64, %c0_35], %56 {strides = array<i32>} : memref<72x256xf32, #tpu.memory_space<vmem>>, vector<8x256xf32>,
    %c0_36 = arith.constant 0 : index
    %c0_37 = arith.constant 0 : index
    %58 = vector.load %arg2[%c0_36, %c0_37] : memref<4x72xf32, #tpu.memory_space<vmem>>, vector<4x72xf32>
    %c0_38 = arith.constant 0 : index
    %c0_39 = arith.constant 0 : index
    %59 = vector.load %arg6[%c0_38, %c0_39] : memref<72x256xf32, #tpu.memory_space<vmem>>, vector<72x256xf32>
    %cst_40 = arith.constant dense<0.000000e+00> : vector<4x256xf32>
    %60 = tpu.matmul %58, %59, %cst_40 {dimension_numbers = #tpu.dot_dimension_numbers<[1], [0], [0], [1], [0, 0, 1, 1], [], []>} : vector<4x72xf32>, vector<72x256xf32>, vector<4x256xf32> -> vector<4x256xf32>
    %cst_41 = arith.constant 0.000000e+00 : f32
    %61 = vector.broadcast %cst_41 : f32 to vector<4x256xf32>
    %62 = arith.maximumf %60, %61 : vector<4x256xf32>
    %c0_42 = arith.constant 0 : index
    %c0_43 = arith.constant 0 : index
    %63 = vector.load %arg3[%c0_42, %c0_43] : memref<4x4xf32, #tpu.memory_space<vmem>>, vector<4x4xf32>
    %cst_44 = arith.constant dense<0.000000e+00> : vector<4x256xf32>
    %64 = tpu.matmul %63, %62, %cst_44 {dimension_numbers = #tpu.dot_dimension_numbers<[1], [0], [0], [1], [0, 0, 1, 1], [], []>} : vector<4x4xf32>, vector<4x256xf32>, vector<4x256xf32> -> vector<4x256xf32>
    %65 = arith.addf %1, %64 : vector<4x256xf32>
    %c0_45 = arith.constant 0 : index
    %c0_46 = arith.constant 0 : index
    %c0_47 = arith.constant 0 : index
    %66 = vector.load %arg4[%c0_45, %c0_46, %c0_47] : memref<1x4x256xf32, #tpu.memory_space<vmem>>, vector<1x4x256xf32>
    %67 = vector.shape_cast %66 : vector<1x4x256xf32> to vector<4x256xf32>
    %68 = vector.shape_cast %65 : vector<4x256xf32> to vector<1x4x256xf32>
    tpu.vector_store %arg4[%c0_45, %c0_46, %c0_47], %68 {strides = array<i32>} : memref<1x4x256xf32, #tpu.memory_space<vmem>>, vector<1x4x256xf32>,
    return
  }
  func.func @transform_0(%arg0: i32) -> (i32, i32, i32) {
    %c0_i32 = arith.constant 0 : i32
    %c0_i32_0 = arith.constant 0 : i32
    %c0_i32_1 = arith.constant 0 : i32
    return %arg0, %c0_i32, %c0_i32_0 : i32, i32, i32
  }
  func.func @transform_1(%arg0: i32) -> (i32, i32) {
    %c0_i32 = arith.constant 0 : i32
    %c0_i32_0 = arith.constant 0 : i32
    %c0_i32_1 = arith.constant 0 : i32
    return %c0_i32, %c0_i32_0 : i32, i32
  }
  func.func @transform_2(%arg0: i32) -> (i32, i32) {
    %c0_i32 = arith.constant 0 : i32
    %c0_i32_0 = arith.constant 0 : i32
    %c0_i32_1 = arith.constant 0 : i32
    return %c0_i32, %c0_i32_0 : i32, i32
  }
  func.func @transform_3(%arg0: i32) -> (i32, i32, i32) {
    %c0_i32 = arith.constant 0 : i32
    %c0_i32_0 = arith.constant 0 : i32
    %c0_i32_1 = arith.constant 0 : i32
    return %arg0, %c0_i32, %c0_i32_0 : i32, i32, i32
  }
}

</mosaic_0001>

<llo_original>
// kernel: tpu_custom_call.1
$region0: #{tpu_custom_call.1}
  #allocation0 [shape = 'u32[]', space=smem, size = 0x4, offset = 0x4, fixed_abs, tag = 'smem constant byte address 0x4 - core index']
  #allocation1 [shape = 'u32[144,128]{1,0:T(1,128)}', space=vmem, size = 0x12000, scoped, tag = 'internal scratch']
  #allocation2 [shape = 'f32[8,512]{1,0:T(8,128)}', space=vmem, size = 0x4000, scoped, tag = 'scratch operand']
  #allocation3 [shape = 'f32[72,256]{1,0:T(8,128)}', space=vmem, size = 0x12000, scoped, tag = 'scratch operand']
  %s0 = inlined_call_operand.hbm [shape: f32[2,4,256], index: 0, kind: input, shape index: {}]
  %s1 = inlined_call_operand.hbm [shape: f32[4,72], index: 1, kind: input, shape index: {}]
  %s2 = inlined_call_operand.hbm [shape: f32[4,4], index: 2, kind: input, shape index: {}]
  %s3 = inlined_call_operand.hbm [shape: f32[2,4,256], index: 3, kind: output, shape index: {}]
  %s4 = sld [smem:[#allocation0]]
  $region57: #{tpu_custom_call.1} parent=0
    _
  %s6 = ssub.s32 1, %s4
  %s7 = scalar_select 0, %s6, %s4
  $region1: #{tpu_custom_call.1} parent=0
    #allocation4 [shape = 'u8[8192]{0}', space=vmem, size = 0x2000, scoped, tag = 'input window, operand 0']
    #allocation5 [shape = 's32[2]{0}', space=sflag, size = 0x8, scoped, tag = 'scoped memory for tpu_custom_call.1']
    #allocation6 [shape = 's32[2]{0}', space=sflag, size = 0x8, scoped, tag = 'scoped memory for tpu_custom_call.1']
    #allocation7 [shape = 'u8[2048]{0}', space=vmem, size = 0x800, scoped, tag = 'input window, operand 1, single buffered']
    #allocation8 [shape = 's32[1]{0}', space=sflag, size = 0x4, scoped, tag = 'scoped memory for tpu_custom_call.1']
    #allocation9 [shape = 'u8[2048]{0}', space=vmem, size = 0x800, scoped, tag = 'input window, operand 2, single buffered']
    #allocation10 [shape = 'u8[8192]{0}', space=vmem, size = 0x2000, scoped, tag = 'output window, operand 0']
    %8 = vsyncpa [#allocation5], 0
    %s9 = scalar_lea.sflag [#allocation5], 1
    %10 = vsyncpa %s9, 0
    %11 = vsyncpa [#allocation8], 0
    %12 = vsyncpa [#allocation6], 0
    %s13 = scalar_lea.sflag [#allocation6], 1
    %14 = vsyncpa %s13, 0
    loop: start=0, step=1, limit=4
    $region2: #{tpu_custom_call.1} parent=1 // loop_pre_header
      _
    $region3: #{tpu_custom_call.1} parent=1 // loop_header
      %s16 = sphi 0, %s20
      %p17 = scmp.ge.s32.totalorder %s16, 4
      %s26 = sphi 0, %s28
      %s29 = sphi 0, %s26
      %s30 = sphi 0, %s29
      %s46 = sphi 0, %s30
      %s50 = sphi 0, %s50
      %s52 = sphi 0, %s50
      %s53 = sphi 0, %s52
      %s67 = sphi 0, %s53
      %s71 = sphi 0, %s71
      %s73 = sphi 0, %s71
      %s74 = sphi 0, %s73
      %s88 = sphi 0, %s74
      %s94 = sphi 0, %s96
      %s97 = sphi 0, %s94
      %s98 = sphi 0, %s97
      %s114 = sphi 0, %s98
    $region4: #{tpu_custom_call.1} parent=1 // loop_header_branch
      %19 = sbr.rel (%p17) target = $region8
    $region5: #{tpu_custom_call.1} parent=1 // loop_body
      %s21 = ssub.s32 %s16, 1
      %s22 = ssub.s32 %s16, 2
      %s23 = sadd.s32 %s16, 1
      %s24 = ssub.s32 %s16, %s23
      %p25 = scmp.eq.s32.totalorder %s24, 0
      %s27 = sadd.s32 %s26, 1
      %s28 = scalar_select %p25, %s26, %s27
      %p31 = pneg %p25
      %p32 = scmp.eq.s32.totalorder %s16, 1
      %p33 = por %p31, %p32
      %p34 = scmp.ne.s32.totalorder %s26, %s29
      %p35 = scmp.eq.s32.totalorder %s16, 0
      %p36 = por %p34, %p35
      %p37 = scmp.ne.s32.totalorder %s26, %s29
      %p38 = scmp.eq.s32.totalorder %s21, 1
      %p39 = por %p37, %p38
      %p40 = scmp.ne.s32.totalorder %s29, %s30
      %p41 = scmp.eq.s32.totalorder %s21, 0
      %p42 = por %p40, %p41
      %p43 = scmp.ne.s32.totalorder %s29, %s30
      %p44 = scmp.eq.s32.totalorder %s22, 1
      %p45 = por %p43, %p44
      %p47 = scmp.ne.s32.totalorder %s30, %s46
      %p48 = scmp.eq.s32.totalorder %s22, 0
      %p49 = por %p47, %p48
      %s51 = sadd.s32 %s50, 1
      %p54 = scmp.eq.s32.totalorder %s16, 1
      %p55 = scmp.ne.s32.totalorder %s50, %s52
      %p56 = scmp.eq.s32.totalorder %s16, 0
      %p57 = por %p55, %p56
      %p58 = scmp.ne.s32.totalorder %s50, %s52
      %p59 = scmp.eq.s32.totalorder %s21, 1
      %p60 = por %p58, %p59
      %p61 = scmp.ne.s32.totalorder %s52, %s53
      %p62 = scmp.eq.s32.totalorder %s21, 0
      %p63 = por %p61, %p62
      %p64 = scmp.ne.s32.totalorder %s52, %s53
      %p65 = scmp.eq.s32.totalorder %s22, 1
      %p66 = por %p64, %p65
      %p68 = scmp.ne.s32.totalorder %s53, %s67
      %p69 = scmp.eq.s32.totalorder %s22, 0
      %p70 = por %p68, %p69
      %s72 = sadd.s32 %s71, 1
      %p75 = scmp.eq.s32.totalorder %s16, 1
      %p76 = scmp.ne.s32.totalorder %s71, %s73
      %p77 = scmp.eq.s32.totalorder %s16, 0
      %p78 = por %p76, %p77
      %p79 = scmp.ne.s32.totalorder %s71, %s73
      %p80 = scmp.eq.s32.totalorder %s21, 1
      %p81 = por %p79, %p80
      %p82 = scmp.ne.s32.totalorder %s73, %s74
      %p83 = scmp.eq.s32.totalorder %s21, 0
      %p84 = por %p82, %p83
      %p85 = scmp.ne.s32.totalorder %s73, %s74
      %p86 = scmp.eq.s32.totalorder %s22, 1
      %p87 = por %p85, %p86
      %p89 = scmp.ne.s32.totalorder %s74, %s88
      %p90 = scmp.eq.s32.totalorder %s22, 0
      %p91 = por %p89, %p90
      %s92 = ssub.s32 %s16, %s23
      %p93 = scmp.eq.s32.totalorder %s92, 0
      %s95 = sadd.s32 %s94, 1
      %s96 = scalar_select %p93, %s94, %s95
      %p99 = pneg %p93
      %p100 = scmp.eq.s32.totalorder %s16, 1
      %p101 = por %p99, %p100
      %p102 = scmp.ne.s32.totalorder %s94, %s97
      %p103 = scmp.eq.s32.totalorder %s16, 0
      %p104 = por %p102, %p103
      %p105 = scmp.ne.s32.totalorder %s94, %s97
      %p106 = scmp.eq.s32.totalorder %s21, 1
      %p107 = por %p105, %p106
      %p108 = scmp.ne.s32.totalorder %s97, %s98
      %p109 = scmp.eq.s32.totalorder %s21, 0
      %p110 = por %p108, %p109
      %p111 = scmp.ne.s32.totalorder %s97, %s98
      %p112 = scmp.eq.s32.totalorder %s22, 1
      %p113 = por %p111, %p112
      %p115 = scmp.ne.s32.totalorder %s98, %s114
      %p116 = scmp.eq.s32.totalorder %s22, 0
      %p117 = por %p115, %p116
      %p118 = scmp.le.s32.totalorder 1, %s16
      %p119 = scmp.lt.s32.totalorder %s16, 3
      %p120 = pnand %p118, %p119
      %p121 = pneg %p120
      // Predicated region
      $region9: #{tpu_custom_call.1} parent=5 // pred_check
        _
      $region10: #{tpu_custom_call.1} parent=5 // pred_check_branch
        %123 = sbr.rel (%p120) target = $region12
      $region11: #{tpu_custom_call.1} parent=5 // pred_region
        %s124 = ssub.s32 %s16, 1
        // Predicated region
        $region13: #{tpu_custom_call.1} parent=11 // pred_check
          %p125 = pneg %p63
        $region14: #{tpu_custom_call.1} parent=11 // pred_check_branch
          %127 = sbr.rel (%p125) target = $region16
        $region15: #{tpu_custom_call.1} parent=11 // pred_region
          %s129 = ssub.s32 64, 64
          %130 = vsyncadd [#allocation8], %s129
          %s132 = sshll.u32 [#allocation7], 4
          %s133 = int_to_ptr.vmem [resolvable:$true] %s132
          %135 = dma.hbm_to_vmem [thread:$0]  %s1, 64, %s133, [#allocation8]
        $region16: #{tpu_custom_call.1} parent=11 // pred_fallthru
          _
        // Predicated region
        $region17: #{tpu_custom_call.1} parent=11 // pred_check
          %p136 = pneg %p84
        $region18: #{tpu_custom_call.1} parent=11 // pred_check_branch
          %138 = sbr.rel (%p136) target = $region20
        $region19: #{tpu_custom_call.1} parent=11 // pred_region
          %s140 = ssub.s32 64, 64
          %141 = vsyncadd [#allocation8], %s140
          %s143 = sshll.u32 [#allocation9], 4
          %s144 = int_to_ptr.vmem [resolvable:$true] %s143
          %146 = dma.hbm_to_vmem [thread:$0]  %s2, 64, %s144, [#allocation8]
        $region20: #{tpu_custom_call.1} parent=11 // pred_fallthru
          _
      $region12: #{tpu_custom_call.1} parent=5 // pred_fallthru
        _
      %p147 = scmp.lt.s32.totalorder %s16, 2
      // Predicated region
      $region21: #{tpu_custom_call.1} parent=5 // pred_check
        %p148 = pneg %p147
      $region22: #{tpu_custom_call.1} parent=5 // pred_check_branch
        %150 = sbr.rel (%p148) target = $region24
      $region23: #{tpu_custom_call.1} parent=5 // pred_region
        // Predicated region
        $region25: #{tpu_custom_call.1} parent=23 // pred_check
          %p151 = pneg %p36
        $region26: #{tpu_custom_call.1} parent=23 // pred_check_branch
          %153 = sbr.rel (%p151) target = $region28
        $region27: #{tpu_custom_call.1} parent=23 // pred_region
          %s154 = sand.u32 %s26, 1
          %s155 = scalar_lea.sflag [#allocation5], %s154
          %s156 = sand.u32 %s26, 1
          %s157 = smul.addr %s156, 8
          %s158 = scalar_lea.vmem [#allocation4], %s157
          %s160 = ssub.s32 128, 128
          %161 = vsyncadd %s155, %s160
          %s162 = smul.addr %s16, 2
          %s163 = smul.addr %s162, 64
          %s164 = scalar_lea.hbm %s0, %s163
          %s166 = sshll.u32 %s158, 4
          %s167 = int_to_ptr.vmem [resolvable:$true] %s166
          %169 = dma.hbm_to_vmem [thread:$0]  %s164, 128, %s167, %s155
        $region28: #{tpu_custom_call.1} parent=23 // pred_fallthru
          _
      $region24: #{tpu_custom_call.1} parent=5 // pred_fallthru
        _
      %p170 = scmp.le.s32.totalorder 1, %s16
      %p171 = scmp.lt.s32.totalorder %s16, 3
      %p172 = pnand %p170, %p171
      %p173 = pneg %p172
      // Predicated region
      $region29: #{tpu_custom_call.1} parent=5 // pred_check
        _
      $region30: #{tpu_custom_call.1} parent=5 // pred_check_branch
        %175 = sbr.rel (%p172) target = $region32
      $region31: #{tpu_custom_call.1} parent=5 // pred_region
        %s176 = ssub.s32 %s16, 1
        %s177 = sand.u32 %s29, 1
        %s178 = scalar_lea.sflag [#allocation5], %s177
        %s179 = sand.u32 %s29, 1
        %s180 = smul.addr %s179, 8
        %s181 = scalar_lea.vmem [#allocation4], %s180
        // Predicated region
        $region33: #{tpu_custom_call.1} parent=31 // pred_check
          %p182 = pneg %p42
        $region34: #{tpu_custom_call.1} parent=31 // pred_check_branch
          %184 = sbr.rel (%p182) target = $region36
        $region35: #{tpu_custom_call.1} parent=31 // pred_region
          %185 = dma.done %s178, 128
        $region36: #{tpu_custom_call.1} parent=31 // pred_fallthru
          _
        // Predicated region
        $region37: #{tpu_custom_call.1} parent=31 // pred_check
          %p186 = pneg %p63
        $region38: #{tpu_custom_call.1} parent=31 // pred_check_branch
          %188 = sbr.rel (%p186) target = $region40
        $region39: #{tpu_custom_call.1} parent=31 // pred_region
          %189 = dma.done [#allocation8], 64
        $region40: #{tpu_custom_call.1} parent=31 // pred_fallthru
          _
        // Predicated region
        $region41: #{tpu_custom_call.1} parent=31 // pred_check
          %p190 = pneg %p84
        $region42: #{tpu_custom_call.1} parent=31 // pred_check_branch
          %192 = sbr.rel (%p190) target = $region44
        $region43: #{tpu_custom_call.1} parent=31 // pred_region
          %193 = dma.done [#allocation8], 64
        $region44: #{tpu_custom_call.1} parent=31 // pred_fallthru
          _
        %s194 = sand.u32 %s29, 1
        %s195 = scalar_lea.sflag [#allocation5], %s194
        %s196 = sand.u32 %s29, 1
        %s197 = smul.addr %s196, 8
        %s198 = scalar_lea.vmem [#allocation4], %s197
        %p199 = pneg %p42
        %p200 = pneg %p39
        %p201 = pneg %p63
        %p202 = pneg %p60
        %p203 = pneg %p84
        %p204 = pneg %p81
        %p205 = pneg %p110
        %p206 = pneg %p107
        %s207 = sand.u32 %s97, 1
        %s208 = scalar_lea.sflag [#allocation6], %s207
        %s209 = sand.u32 %s97, 1
        %s210 = smul.addr %s209, 8
        %s211 = scalar_lea.vmem [#allocation10], %s210
        %v212 = vld [vmem:[%s181] sm:$0xff]
        %v213 = vmax.f32 %v212, 0.0
        %214 = vst [vmem:[#allocation2] sm:$0xff] 0.0
        %215 = vst [vmem:[#allocation2 + $0x8] sm:$0xff] 0.0
        %216 = vst [vmem:[#allocation2 + $0x10] sm:$0xff] 0.0
        %217 = vst [vmem:[#allocation2 + $0x18] sm:$0xff] 0.0
        %v219 = vcombine.high %v213, %v213
        %221 = vst [vmem:[#allocation2 + $0x8] sm:$0xf] %v213
        %222 = vst [vmem:[#allocation2 + $0x10] sm:$0xf] %v219
        %v223 = vlaneseq
        %v224 = vand.u32 %v223, 127
        %v225 = vadd.s32 %v224, 128
        %vm226 = vcmp.lt.s32.totalorder %v224, 0
        %v227 = vsub.s32 0, %v224
        %v228 = vsel %vm226, %v227, %v224
        %v229 = vshrl.u32 %v228, 4
        %v230 = vand.u32 %v228, 15
        %v231 = vsub.s32 0, %v230
        %v232 = vsel %vm226, %v231, %v230
        %vm233 = vcmp.lt.s32.totalorder %v225, 0
        %v234 = vsub.s32 0, %v225
        %v235 = vsel %vm233, %v234, %v225
        %v236 = vshrl.u32 %v235, 4
        %v237 = vand.u32 %v235, 15
        %v238 = vsub.s32 0, %v237
        %v239 = vsel %vm233, %v238, %v237
        %vm240 = vcmp.ne.s32.totalorder %v232, 0
        %vm241 = vcmp.ne.s32.totalorder %v239, 0
        %vm242 = vcmp.lt.s32.totalorder %v232, 0
        %vm243 = vcmp.lt.s32.totalorder %v239, 0
        %vm244 = vmand %vm242, %vm240
        %vm245 = vmand %vm243, %vm241
        %v246 = vadd.s32 %v232, 16
        %v247 = vadd.s32 %v239, 16
        %v248 = vsel %vm244, %v246, %v232
        %v249 = vsel %vm245, %v247, %v239
        %vm250 = vcmp.ne.s32.totalorder %v248, 0
        %vm251 = vcmp.ne.s32.totalorder %v249, 0
        %vm252 = vcmp.ne.s32.totalorder %v248, 15
        %vm253 = vcmp.ne.s32.totalorder %v249, 15
        %v254 = vld [vmem:[#allocation2] sm:$0xff]
        %v255 = vld [vmem:[#allocation2 + $0x8] sm:$0xff]
        %v256 = vld [vmem:[#allocation2 + $0x10] sm:$0xff]
        %260 = vrot.lane.b32.xlu0 %v254, 17
        %v261 = vpop.permute.xlu0 %260
        %262 = vrot.lane.b32.xlu0 %v255, 17
        %v263 = vpop.permute.xlu0 %262
        %264 = vrot.lane.b32.xlu0 %v256, 17
        %v265 = vpop.permute.xlu0 %264
        %vm266 = vcmask 138240
        %v267 = vsel %vm266, %v261, %v263
        %v268 = vsel %vm266, %v263, %v265
        %v271 = vsel %vm250, %v267, 0.0
        %v272 = vsel %vm251, %v268, 0.0
        %273 = vst [vmem:[#allocation3] sm:$0xff] %v271
        %274 = vst [vmem:[#allocation3 + $0x8] sm:$0xff] %v272
        %v275 = vld [vmem:[#allocation2] sm:$0xff]
        %v276 = vld [vmem:[#allocation2 + $0x8] sm:$0xff]
        %v277 = vld [vmem:[#allocation2 + $0x10] sm:$0xff]
        %281 = vrot.lane.b32.xlu0 %v275, 16
        %v282 = vpop.permute.xlu0 %281
        %283 = vrot.lane.b32.xlu0 %v276, 16
        %v284 = vpop.permute.xlu0 %283
        %285 = vrot.lane.b32.xlu0 %v277, 16
        %v286 = vpop.permute.xlu0 %285
        %vm287 = vcmask 130048
        %v288 = vsel %vm287, %v282, %v284
        %v289 = vsel %vm287, %v284, %v286
        %292 = vst [vmem:[#allocation3 + $0x10] sm:$0xff] %v288
        %293 = vst [vmem:[#allocation3 + $0x18] sm:$0xff] %v289
        %v294 = vld [vmem:[#allocation2] sm:$0xff]
        %v295 = vld [vmem:[#allocation2 + $0x8] sm:$0xff]
        %v296 = vld [vmem:[#allocation2 + $0x10] sm:$0xff]
        %300 = vrot.lane.b32.xlu0 %v294, 15
        %v301 = vpop.permute.xlu0 %300
        %302 = vrot.lane.b32.xlu0 %v295, 15
        %v303 = vpop.permute.xlu0 %302
        %304 = vrot.lane.b32.xlu0 %v296, 15
        %v305 = vpop.permute.xlu0 %304
        %vm306 = vcmask 121856
        %v307 = vsel %vm306, %v301, %v303
        %v308 = vsel %vm306, %v303, %v305
        %v311 = vsel %vm252, %v307, 0.0
        %v312 = vsel %vm253, %v308, 0.0
        %313 = vst [vmem:[#allocation3 + $0x20] sm:$0xff] %v311
        %314 = vst [vmem:[#allocation3 + $0x28] sm:$0xff] %v312
        %v315 = vld [vmem:[#allocation2] sm:$0xff]
        %v316 = vld [vmem:[#allocation2 + $0x8] sm:$0xff]
        %v317 = vld [vmem:[#allocation2 + $0x10] sm:$0xff]
        %321 = vrot.lane.b32.xlu0 %v315, 1
        %v322 = vpop.permute.xlu0 %321
        %323 = vrot.lane.b32.xlu0 %v316, 1
        %v324 = vpop.permute.xlu0 %323
        %325 = vrot.lane.b32.xlu0 %v317, 1
        %v326 = vpop.permute.xlu0 %325
        %vm327 = vcmask 7168
        %v328 = vsel %vm327, %v322, %v324
        %v329 = vsel %vm327, %v324, %v326
        %v332 = vsel %vm250, %v328, 0.0
        %v333 = vsel %vm251, %v329, 0.0
        %334 = vst [vmem:[#allocation3 + $0x30] sm:$0xff] %v332
        %335 = vst [vmem:[#allocation3 + $0x38] sm:$0xff] %v333
        %v336 = vld [vmem:[#allocation2 + $0x8] sm:$0xff]
        %v337 = vld [vmem:[#allocation2 + $0x10] sm:$0xff]
        %338 = vst [vmem:[#allocation3 + $0x40] sm:$0xff] %v336
        %339 = vst [vmem:[#allocation3 + $0x48] sm:$0xff] %v337
        %v340 = vld [vmem:[#allocation2 + $0x8] sm:$0xff]
        %v341 = vld [vmem:[#allocation2 + $0x10] sm:$0xff]
        %v342 = vld [vmem:[#allocation2 + $0x18] sm:$0xff]
        %346 = vrot.lane.b32.xlu0 %v340, 127
        %v347 = vpop.permute.xlu0 %346
        %348 = vrot.lane.b32.xlu0 %v341, 127
        %v349 = vpop.permute.xlu0 %348
        %350 = vrot.lane.b32.xlu0 %v342, 127
        %v351 = vpop.permute.xlu0 %350
        %vm352 = vcmask 1039360
        %v353 = vsel %vm352, %v347, %v349
        %v354 = vsel %vm352, %v349, %v351
        %v357 = vsel %vm252, %v353, 0.0
        %v358 = vsel %vm253, %v354, 0.0
        %359 = vst [vmem:[#allocation3 + $0x50] sm:$0xff] %v357
        %360 = vst [vmem:[#allocation3 + $0x58] sm:$0xff] %v358
        %v361 = vld [vmem:[#allocation2 + $0x8] sm:$0xff]
        %v362 = vld [vmem:[#allocation2 + $0x10] sm:$0xff]
        %v363 = vld [vmem:[#allocation2 + $0x18] sm:$0xff]
        %367 = vrot.lane.b32.xlu0 %v361, 113
        %v368 = vpop.permute.xlu0 %367
        %369 = vrot.lane.b32.xlu0 %v362, 113
        %v370 = vpop.permute.xlu0 %369
        %371 = vrot.lane.b32.xlu0 %v363, 113
        %v372 = vpop.permute.xlu0 %371
        %vm373 = vcmask 924672
        %v374 = vsel %vm373, %v368, %v370
        %v375 = vsel %vm373, %v370, %v372
        %v378 = vsel %vm250, %v374, 0.0
        %v379 = vsel %vm251, %v375, 0.0
        %380 = vst [vmem:[#allocation3 + $0x60] sm:$0xff] %v378
        %381 = vst [vmem:[#allocation3 + $0x68] sm:$0xff] %v379
        %v382 = vld [vmem:[#allocation2 + $0x8] sm:$0xff]
        %v383 = vld [vmem:[#allocation2 + $0x10] sm:$0xff]
        %v384 = vld [vmem:[#allocation2 + $0x18] sm:$0xff]
        %388 = vrot.lane.b32.xlu0 %v382, 112
        %v389 = vpop.permute.xlu0 %388
        %390 = vrot.lane.b32.xlu0 %v383, 112
        %v391 = vpop.permute.xlu0 %390
        %392 = vrot.lane.b32.xlu0 %v384, 112
        %v393 = vpop.permute.xlu0 %392
        %vm394 = vcmask 916480
        %v395 = vsel %vm394, %v389, %v391
        %v396 = vsel %vm394, %v391, %v393
        %399 = vst [vmem:[#allocation3 + $0x70] sm:$0xff] %v395
        %400 = vst [vmem:[#allocation3 + $0x78] sm:$0xff] %v396
        %v401 = vld [vmem:[#allocation2 + $0x8] sm:$0xff]
        %v402 = vld [vmem:[#allocation2 + $0x10] sm:$0xff]
        %v403 = vld [vmem:[#allocation2 + $0x18] sm:$0xff]
        %407 = vrot.lane.b32.xlu0 %v401, 111
        %v408 = vpop.permute.xlu0 %407
        %409 = vrot.lane.b32.xlu0 %v402, 111
        %v410 = vpop.permute.xlu0 %409
        %411 = vrot.lane.b32.xlu0 %v403, 111
        %v412 = vpop.permute.xlu0 %411
        %vm413 = vcmask 908288
        %v414 = vsel %vm413, %v408, %v410
        %v415 = vsel %vm413, %v410, %v412
        %v418 = vsel %vm252, %v414, 0.0
        %v419 = vsel %vm253, %v415, 0.0
        %420 = vst [vmem:[#allocation3 + $0x80] sm:$0xff] %v418
        %421 = vst [vmem:[#allocation3 + $0x88] sm:$0xff] %v419
        %v422 = vld [vmem:[#allocation7] sm:$0xf]
        %v423 = vld [vmem:[#allocation3] sm:$0xff]
        %v424 = vld [vmem:[#allocation3 + $0x8] sm:$0xff]
        %v425 = vld [vmem:[#allocation3 + $0x10] sm:$0xff]
        %v426 = vld [vmem:[#allocation3 + $0x18] sm:$0xff]
        %v427 = vld [vmem:[#allocation3 + $0x20] sm:$0xff]
        %v428 = vld [vmem:[#allocation3 + $0x28] sm:$0xff]
        %v429 = vld [vmem:[#allocation3 + $0x30] sm:$0xff]
        %v430 = vld [vmem:[#allocation3 + $0x38] sm:$0xff]
        %v431 = vld [vmem:[#allocation3 + $0x40] sm:$0xff]
        %v432 = vld [vmem:[#allocation3 + $0x48] sm:$0xff]
        %v433 = vld [vmem:[#allocation3 + $0x50] sm:$0xff]
        %v434 = vld [vmem:[#allocation3 + $0x58] sm:$0xff]
        %v435 = vld [vmem:[#allocation3 + $0x60] sm:$0xff]
        %v436 = vld [vmem:[#allocation3 + $0x68] sm:$0xff]
        %v437 = vld [vmem:[#allocation3 + $0x70] sm:$0xff]
        %v438 = vld [vmem:[#allocation3 + $0x78] sm:$0xff]
        %v439 = vld [vmem:[#allocation3 + $0x80] sm:$0xff]
        %v440 = vld [vmem:[#allocation3 + $0x88] sm:$0xff]
        %vm441 = vcmask 588800
        %v443 = vsel %vm441, %v422, 0
        %445 = vmatprep.subr.mxu0 0.0
        %446 = vmatpush1.msra.mxu0 0.0
        %447 = vmatprep.subr.mxu0 0.0
        %448 = vmatpush1.msra.mxu0 0.0
        %449 = vmatprep.subr.mxu0 0.0
        %450 = vmatpush1.msra.mxu0 0.0
        %451 = vmatprep.subr.mxu0 0.0
        %452 = vmatpush1.msra.mxu0 0.0
        %453 = vmatprep.subr.mxu0 0.0
        %454 = vmatpush1.msra.mxu0 0.0
        %455 = vmatprep.subr.mxu0 0.0
        %456 = vmatpush1.msra.mxu0 0.0
        %457 = vmatprep.subr.mxu0 0.0
        %458 = vmatpush1.msra.mxu0 0.0
        %459 = vmatprep.subr.mxu0 %v440
        %460 = vmatpush1.msra.mxu0 %v439
        %461 = vmatprep.subr.mxu0 %v438
        %462 = vmatpush1.msra.mxu0 %v437
        %463 = vmatprep.subr.mxu0 %v436
        %464 = vmatpush1.msra.mxu0 %v435
        %465 = vmatprep.subr.mxu0 %v434
        %466 = vmatpush1.msra.mxu0 %v433
        %467 = vmatprep.subr.mxu0 %v432
        %468 = vmatpush1.msra.mxu0 %v431
        %469 = vmatprep.subr.mxu0 %v430
        %470 = vmatpush1.msra.mxu0 %v429
        %471 = vmatprep.subr.mxu0 %v428
        %472 = vmatpush1.msra.mxu0 %v427
        %473 = vmatprep.subr.mxu0 %v426
        %474 = vmatpush1.msra.mxu0 %v425
        %475 = vmatprep.subr.mxu0 %v424
        %476 = vmatpush1.msra.mxu0 %v423
        %477 = vmatprep.subr.mxu0 0.0
        %478 = vmatpush2.msra.mxu0 0.0
        %479 = vmatprep.subr.mxu0 0.0
        %480 = vmatpush2.msra.mxu0 0.0
        %481 = vmatprep.subr.mxu0 0.0
        %482 = vmatpush2.msra.mxu0 0.0
        %483 = vmatprep.subr.mxu0 0.0
        %484 = vmatpush2.msra.mxu0 0.0
        %485 = vmatprep.subr.mxu0 0.0
        %486 = vmatpush2.msra.mxu0 0.0
        %487 = vmatprep.subr.mxu0 0.0
        %488 = vmatpush2.msra.mxu0 0.0
        %489 = vmatprep.subr.mxu0 0.0
        %490 = vmatpush2.msra.mxu0 0.0
        %491 = vmatprep.subr.mxu0 0.0
        %492 = vmatpush2.msra.mxu0 0.0
        %493 = vmatprep.subr.mxu0 0.0
        %494 = vmatpush2.msra.mxu0 0.0
        %495 = vmatprep.subr.mxu0 0.0
        %496 = vmatpush2.msra.mxu0 0.0
        %497 = vmatprep.subr.mxu0 0.0
        %498 = vmatpush2.msra.mxu0 0.0
        %499 = vmatprep.subr.mxu0 0.0
        %500 = vmatpush2.msra.mxu0 0.0
        %501 = vmatprep.subr.mxu0 0.0
        %502 = vmatpush2.msra.mxu0 0.0
        %503 = vmatprep.subr.mxu0 0.0
        %504 = vmatpush2.msra.mxu0 0.0
        %505 = vmatprep.subr.mxu0 0.0
        %506 = vmatpush2.msra.mxu0 0.0
        %507 = vmatprep.subr.mxu0 0.0
        %508 = vmatpush2.msra.mxu0 0.0
        %509 = vmatprep.mubr.f32.mxu0 0.0
        %510 = vmatmul.mubr.f32.gmra.mxu0 %v443
        %v511 = vpop.f32.mrf.mxu0
        %v512 = vadd.f32 0.0, %v511
        %v513 = vpop.f32.mrf.mxu0
        %v514 = vadd.f32 0.0, %v513
        %515 = vdwg.mxu0
        %v516 = vmax.f32 %v512, 0.0
        %v517 = vmax.f32 %v514, 0.0
        %v518 = vld [vmem:[#allocation9] sm:$0xf]
        %vm519 = vcmask 31744
        %v521 = vsel %vm519, %v518, 0
        %vm523 = vcmask 1043456
        %v525 = vsel %vm523, %v516, 0
        %v528 = vsel %vm523, %v517, 0
        %530 = vmatprep.subr.mxu0 0.0
        %531 = vmatpush1.msra.mxu0 0.0
        %532 = vmatprep.subr.mxu0 0.0
        %533 = vmatpush1.msra.mxu0 0.0
        %534 = vmatprep.subr.mxu0 0.0
        %535 = vmatpush1.msra.mxu0 0.0
        %536 = vmatprep.subr.mxu0 0.0
        %537 = vmatpush1.msra.mxu0 0.0
        %538 = vmatprep.subr.mxu0 0.0
        %539 = vmatpush1.msra.mxu0 0.0
        %540 = vmatprep.subr.mxu0 0.0
        %541 = vmatpush1.msra.mxu0 0.0
        %542 = vmatprep.subr.mxu0 0.0
        %543 = vmatpush1.msra.mxu0 0.0
        %544 = vmatprep.subr.mxu0 0.0
        %545 = vmatpush1.msra.mxu0 0.0
        %546 = vmatprep.subr.mxu0 0.0
        %547 = vmatpush1.msra.mxu0 0.0
        %548 = vmatprep.subr.mxu0 0.0
        %549 = vmatpush1.msra.mxu0 0.0
        %550 = vmatprep.subr.mxu0 0.0
        %551 = vmatpush1.msra.mxu0 0.0
        %552 = vmatprep.subr.mxu0 0.0
        %553 = vmatpush1.msra.mxu0 0.0
        %554 = vmatprep.subr.mxu0 0.0
        %555 = vmatpush1.msra.mxu0 0.0
        %556 = vmatprep.subr.mxu0 0.0
        %557 = vmatpush1.msra.mxu0 0.0
        %558 = vmatprep.subr.mxu0 0.0
        %559 = vmatpush1.msra.mxu0 0.0
        %560 = vmatprep.subr.mxu0 %v528
        %561 = vmatpush1.msra.mxu0 %v525
        %562 = vmatprep.subr.mxu0 0.0
        %563 = vmatpush2.msra.mxu0 0.0
        %564 = vmatprep.subr.mxu0 0.0
        %565 = vmatpush2.msra.mxu0 0.0
        %566 = vmatprep.subr.mxu0 0.0
        %567 = vmatpush2.msra.mxu0 0.0
        %568 = vmatprep.subr.mxu0 0.0
        %569 = vmatpush2.msra.mxu0 0.0
        %570 = vmatprep.subr.mxu0 0.0
        %571 = vmatpush2.msra.mxu0 0.0
        %572 = vmatprep.subr.mxu0 0.0
        %573 = vmatpush2.msra.mxu0 0.0
        %574 = vmatprep.subr.mxu0 0.0
        %575 = vmatpush2.msra.mxu0 0.0
        %576 = vmatprep.subr.mxu0 0.0
        %577 = vmatpush2.msra.mxu0 0.0
        %578 = vmatprep.subr.mxu0 0.0
        %579 = vmatpush2.msra.mxu0 0.0
        %580 = vmatprep.subr.mxu0 0.0
        %581 = vmatpush2.msra.mxu0 0.0
        %582 = vmatprep.subr.mxu0 0.0
        %583 = vmatpush2.msra.mxu0 0.0
        %584 = vmatprep.subr.mxu0 0.0
        %585 = vmatpush2.msra.mxu0 0.0
        %586 = vmatprep.subr.mxu0 0.0
        %587 = vmatpush2.msra.mxu0 0.0
        %588 = vmatprep.subr.mxu0 0.0
        %589 = vmatpush2.msra.mxu0 0.0
        %590 = vmatprep.subr.mxu0 0.0
        %591 = vmatpush2.msra.mxu0 0.0
        %592 = vmatprep.subr.mxu0 0.0
        %593 = vmatpush2.msra.mxu0 0.0
        %594 = vmatprep.mubr.f32.mxu0 0.0
        %595 = vmatmul.mubr.f32.gmra.mxu0 %v521
        %v596 = vpop.f32.mrf.mxu0
        %v597 = vadd.f32 0.0, %v596
        %v598 = vpop.f32.mrf.mxu0
        %v599 = vadd.f32 0.0, %v598
        %600 = vdwg.mxu0
        %v603 = vcombine.low %v597, %v599
        %v605 = vadd.f32 %v212, %v603
        %606 = vst [vmem:[%s211] sm:$0xff] %v605
        %s607 = sand.u32 %s97, 1
        %s608 = scalar_lea.sflag [#allocation6], %s607
        %s609 = sand.u32 %s97, 1
        %s610 = smul.addr %s609, 8
        %s611 = scalar_lea.vmem [#allocation10], %s610
        // Predicated region
        $region45: #{tpu_custom_call.1} parent=31 // pred_check
          %p612 = pneg %p107
        $region46: #{tpu_custom_call.1} parent=31 // pred_check_branch
          %614 = sbr.rel (%p612) target = $region48
        $region47: #{tpu_custom_call.1} parent=31 // pred_region
          %s616 = ssub.s32 128, 128
          %617 = vsyncadd %s608, %s616
          %s618 = smul.addr %s21, 2
          %s619 = smul.addr %s618, 64
          %s620 = scalar_lea.hbm %s3, %s619
          %s622 = sshll.u32 %s611, 4
          %s623 = int_to_ptr.vmem [resolvable:$true] %s622
          %625 = dma.vmem_to_hbm [thread:$0]  %s623, 128, %s620, %s608
        $region48: #{tpu_custom_call.1} parent=31 // pred_fallthru
          _
      $region32: #{tpu_custom_call.1} parent=5 // pred_fallthru
        _
      %p626 = scmp.le.s32.totalorder 2, %s16
      // Predicated region
      $region49: #{tpu_custom_call.1} parent=5 // pred_check
        %p627 = pneg %p626
      $region50: #{tpu_custom_call.1} parent=5 // pred_check_branch
        %629 = sbr.rel (%p627) target = $region52
      $region51: #{tpu_custom_call.1} parent=5 // pred_region
        %s630 = ssub.s32 %s16, 2
        // Predicated region
        $region53: #{tpu_custom_call.1} parent=51 // pred_check
          %p631 = pneg %p113
        $region54: #{tpu_custom_call.1} parent=51 // pred_check_branch
          %633 = sbr.rel (%p631) target = $region56
        $region55: #{tpu_custom_call.1} parent=51 // pred_region
          %s634 = sand.u32 %s98, 1
          %s635 = scalar_lea.sflag [#allocation6], %s634
          %s636 = sand.u32 %s98, 1
          %s637 = smul.addr %s636, 8
          %s638 = scalar_lea.vmem [#allocation10], %s637
          %639 = dma.done %s635, 128
        $region56: #{tpu_custom_call.1} parent=51 // pred_fallthru
          _
      $region52: #{tpu_custom_call.1} parent=5 // pred_fallthru
        _
    $region6: #{tpu_custom_call.1} parent=1 // loop_footer
      %s20 = sadd.s32 1, %s16
    $region7: #{tpu_custom_call.1} parent=1 // loop_footer_branch
      %15 = sbr.rel target = $region3
    $region8: #{tpu_custom_call.1} parent=1 // loop_exit
      _
    %640 = vsyncpa [#allocation5], 1
    %s641 = scalar_lea.sflag [#allocation5], 1
    %642 = vsyncpa %s641, 1
    %643 = vsyncpa [#allocation8], 1
    %644 = vsyncpa [#allocation6], 1
    %s645 = scalar_lea.sflag [#allocation6], 1
    %646 = vsyncpa %s645, 1

</llo_original>
